<compile_context>
chip_gen: v6e
topology: v6e:2x2x1
jax: 0.10.0
libtpu: 0.0.40
codegen_flags: <defaults>
</compile_context>

<pallas_src>
import functools

import jax
import jax.numpy as jnp
import numpy as np
from jax import lax
from jax.experimental import pallas as pl
from jax.experimental.pallas import tpu as pltpu

_EPS = 1e-10
_LANES = 128
_SUBLANES = 8
_MAX_TILE_ROWS = 2048      # 2048x128 f32 block = 1 MiB per input per buffer


@functools.lru_cache(maxsize=1)
def _num_tensorcores() -> int:
    """Best-effort per-chip TensorCore count (2 on v7x, else 1). Conservative:
    anything ambiguous or unqueryable falls back to 1 so 1-TC chips never pay
    for a fake shard axis."""
    try:
        info = pltpu.get_tpu_info()
    except Exception:
        return 1
    for name in ("num_cores", "core_count", "num_tensorcores",
                 "tensorcores_per_chip", "num_cores_per_chip"):
        val = getattr(info, name, None)
        if isinstance(val, int) and 1 <= val <= 2:
            return val
    return 1


def _custom_loss_kernel(o_ref, t_ref, out_ref, acc_ref, *,
                        rows, tile_rows, steps, needs_mask):
    s = pl.program_id(0)
    i = pl.program_id(1)

    @pl.when(i == 0)
    def _init():
        acc_ref[...] = jnp.zeros_like(acc_ref)

    # Cast after load so narrow dtypes (e.g. bf16) only pay HBM for their width.
    o = o_ref[...].astype(jnp.float32)
    t = t_ref[...].astype(jnp.float32)

    if needs_mask:
        # Ragged tail / duplicated edge blocks: zero both inputs so every term
        # contributes exactly 0 (diff = 0 and p = q = m = eps => log-ratios 0).
        # Masking happens before any log, so garbage in the partial edge block
        # can never produce NaN.
        row_start = (s * steps + i) * tile_rows
        row = lax.broadcasted_iota(jnp.int32, (tile_rows, _LANES), 0)
        valid = row < (rows - row_start)
        o = jnp.where(valid, o, 0.0)
        t = jnp.where(valid, t, 0.0)

    # One layout-preserving reshape per input; (tile_rows,128)->(R,8,128) keeps
    # the axis-0 reduction as plain VPU adds across vregs (no cross-lane XLU).
    o = o.reshape(-1, _SUBLANES, _LANES)
    t = t.reshape(-1, _SUBLANES, _LANES)

    diff = o - t
    p = o + _EPS                  # kl_divergence adds eps to its arguments
    q = t + _EPS
    m = 0.5 * (p + q)             # == 0.5*(o+t) + eps, exactly the torch js m
    lp = jnp.log(p)               # factored logs: 3 EUP ops / element total
    lq = jnp.log(q)
    lm = jnp.log(m)

    acc_ref[0] += jnp.sum(jnp.abs(diff), axis=0)                  # sum |o-t|
    acc_ref[1] += jnp.sum(diff * diff, axis=0)                    # sum (o-t)^2
    acc_ref[2] += jnp.sum(p * (lp - lq), axis=0)                  # KL(o, t)
    acc_ref[3] += jnp.sum(p * (lp - lm) + q * (lq - lm), axis=0)  # KL(o,m)+KL(t,m)

    @pl.when(i == pl.num_programs(1) - 1)
    def _finalize():
        out_ref[0] = acc_ref[...]            # one (4, 8, 128) store per shard


def custom_loss(output, target, mae_fac=1.0, mse_fac=1.0, kl_fac=1.0, js_fac=1.0):
    assert output.shape == target.shape, "output/target must match"
    B, C, H, W = output.shape
    n_total = B * C * H * W            # MAE / MSE normalizer (all elements)
    n_kl = B * H * W                   # KL/JS: sum over dim=1 then mean over rest

    # ---- plan the lane-dense (rows, 128) streaming layout -------------------
    lanes_pad = (-n_total) % _LANES
    rows = (n_total + lanes_pad) // _LANES
    if rows <= _MAX_TILE_ROWS:
        rows_pad = (-rows) % _SUBLANES          # tiny input: one full block
        tile_rows = rows + rows_pad
    else:
        rows_pad = 0
        tile_rows = _MAX_TILE_ROWS              # big input: fixed 2048-row tiles
    rows_arr = rows + rows_pad
    pad = lanes_pad + rows_pad * _LANES

    num_blocks = -(-rows_arr // tile_rows)
    num_shards = _num_tensorcores()
    if num_blocks < num_shards:
        num_shards = 1
    steps = -(-num_blocks // num_shards)
    needs_mask = (num_shards * steps * tile_rows) != rows_arr

    def flat(x):
        x = x.reshape(-1)
        if pad:
            # Only hit when n_total is not a lane/sublane multiple (rare for
            # conv shapes).  Zero padding contributes exactly 0 to every term.
            x = jnp.pad(x, (0, pad))
        return x.reshape(rows_arr, _LANES)

    o2 = flat(output)
    t2 = flat(target)

    if num_shards * steps == num_blocks:
        in_idx = lambda s, i: (s * steps + i, 0)
    else:
        # Over-covering grid (only possible with a real 2-way core split on an
        # odd block count): clamp the DMA to the last real block; its
        # contribution is zeroed in-kernel by the row mask.
        in_idx = lambda s, i: (jnp.minimum(s * steps + i, num_blocks - 1), 0)

    in_spec = pl.BlockSpec((tile_rows, _LANES), in_idx)

    kernel = functools.partial(_custom_loss_kernel, rows=rows_arr,
                               tile_rows=tile_rows, steps=steps,
                               needs_mask=needs_mask)

    itemsize = jnp.dtype(output.dtype).itemsize
    cost = pl.CostEstimate(
        flops=22 * n_total,
        transcendentals=3 * n_total,
        bytes_accessed=2 * n_total * itemsize
        + num_shards * 4 * _SUBLANES * _LANES * 4,
    )

    shard_sem = pltpu.CORE_PARALLEL if num_shards > 1 else pltpu.ARBITRARY

    partials = pl.pallas_call(
        kernel,
        out_shape=jax.ShapeDtypeStruct((num_shards, 4, _SUBLANES, _LANES),
                                       jnp.float32),
        grid_spec=pltpu.PrefetchScalarGridSpec(
            num_scalar_prefetch=0,
            grid=(num_shards, steps),
            in_specs=[in_spec, in_spec],
            out_specs=pl.BlockSpec((1, 4, _SUBLANES, _LANES),
                                   lambda s, i: (s, 0, 0, 0)),
            scratch_shapes=[pltpu.VMEM((4, _SUBLANES, _LANES), jnp.float32)]),
        compiler_params=pltpu.CompilerParams(
            dimension_semantics=(shard_sem, pltpu.ARBITRARY),
            vmem_limit_bytes=32 * 1024 * 1024),
        cost_estimate=cost,
    )(o2, t2)

    # Tiny (num_shards*4*8*128) final combine in plain JAX.
    sums = jnp.sum(partials, axis=(0, 2, 3))           # (4,)
    mae = sums[0] / n_total
    mse = sums[1] / n_total
    kl = sums[2] / n_kl
    js = 0.5 * sums[3] / n_kl
    return (mae_fac * mae
            + mse_fac * mse
            + kl_fac * jnp.maximum(kl, 0.0)            # torch.relu on a scalar
            + js_fac * jnp.maximum(js, 0.0))


def _reference_loss(output, target, mae_fac=1.0, mse_fac=1.0, kl_fac=1.0, js_fac=1.0):
    # Pure-JAX mirror of the PyTorch module, for verification only.
    def kl_div(p, q):
        p = p + _EPS
        q = q + _EPS
        return jnp.sum(p * jnp.log(p / q), axis=1).mean()

    def js_div(p, q):
        m = 0.5 * (p + q)
        return 0.5 * (kl_div(p, m) + kl_div(q, m))

    mae = jnp.mean(jnp.abs(output - target))
    mse = jnp.mean((output - target) ** 2)
    kl = kl_div(output, target)
    js = js_div(output, target)
    return (mae_fac * mae + mse_fac * mse
            + kl_fac * jnp.maximum(kl, 0.0)
            + js_fac * jnp.maximum(js, 0.0))


if __name__ == "__main__":
    key = jax.random.PRNGKey(0)
    # The autoencoder this loss pairs with emits non-negative (sigmoid-like)
    # activations; use uniform(0,1) data so log() is well-defined, as in torch.
    shapes = [(2, 4, 16, 16),     # 2048 elems: single aligned block, no pad
              (4, 3, 37, 29),     # unaligned total -> tiny lane/sublane pad path
              (5, 16, 64, 64),    # 2560 rows -> multi-block + in-kernel edge mask
              (8, 16, 64, 64)]    # 4096 rows -> aligned multi-block, no mask
    for shape in shapes:
        key, k1, k2 = jax.random.split(key, 3)
        output = jax.random.uniform(k1, shape, dtype=jnp.float32,
                                    minval=0.01, maxval=1.0)
        target = jax.random.uniform(k2, shape, dtype=jnp.float32,
                                    minval=0.01, maxval=1.0)
        loss = jax.block_until_ready(custom_loss(output, target))
        ref = _reference_loss(output, target)
        np.testing.assert_allclose(np.asarray(loss), np.asarray(ref),
                                   rtol=2e-4, atol=1e-5)
    print("KERNEL_OK")
</pallas_src>

<mosaic_0001>
module attributes {stable_mosaic.version = 11 : i64} {
  func.func @_custom_loss_kernel(%arg0: i32, %arg1: i32, %arg2: memref<16x128xf32, #tpu.memory_space<vmem>>, %arg3: memref<16x128xf32, #tpu.memory_space<vmem>>, %arg4: memref<1x4x8x128xf32, #tpu.memory_space<vmem>>, %arg5: memref<4x8x128xf32, #tpu.memory_space<vmem>>) attributes {dimension_semantics = [#tpu.dimension_semantics<arbitrary>, #tpu.dimension_semantics<arbitrary>], iteration_bounds = array<i64: 1, 1>, scalar_prefetch = 0 : i64, scratch_operands = 1 : i64, tpu.core_type = #tpu.core_type<tc>, window_params = [{transform_indices = @transform_0, window_bounds = array<i64: 16, 128>}, {transform_indices = @transform_1, window_bounds = array<i64: 16, 128>}, {transform_indices = @transform_2, window_bounds = array<i64: 1, 4, 8, 128>}]} {
    %c0_i32 = arith.constant 0 : i32
    %0 = arith.cmpi eq, %arg1, %c0_i32 : i32
    %1 = arith.extui %0 : i1 to i32
    %c0_i32_0 = arith.constant 0 : i32
    %2 = arith.cmpi ne, %1, %c0_i32_0 : i32
    scf.if %2 {
      %cst_33 = arith.constant 0.000000e+00 : f32
      %58 = vector.broadcast %cst_33 : f32 to vector<4x8x128xf32>
      %c0_34 = arith.constant 0 : index
      %c0_35 = arith.constant 0 : index
      %c0_36 = arith.constant 0 : index
      %59 = vector.load %arg5[%c0_34, %c0_35, %c0_36] : memref<4x8x128xf32, #tpu.memory_space<vmem>>, vector<4x8x128xf32>
      tpu.vector_store %arg5[%c0_34, %c0_35, %c0_36], %58 {strides = array<i32>} : memref<4x8x128xf32, #tpu.memory_space<vmem>>, vector<4x8x128xf32>,
    } else {
    }
    %c0 = arith.constant 0 : index
    %c0_1 = arith.constant 0 : index
    %3 = vector.load %arg2[%c0, %c0_1] : memref<16x128xf32, #tpu.memory_space<vmem>>, vector<16x128xf32>
    %c0_2 = arith.constant 0 : index
    %c0_3 = arith.constant 0 : index
    %4 = vector.load %arg3[%c0_2, %c0_3] : memref<16x128xf32, #tpu.memory_space<vmem>>, vector<16x128xf32>
    %5 = vector.shape_cast %3 : vector<16x128xf32> to vector<2x8x128xf32>
    %6 = vector.shape_cast %4 : vector<16x128xf32> to vector<2x8x128xf32>
    %7 = arith.subf %5, %6 : vector<2x8x128xf32>
    %cst = arith.constant 1.000000e-10 : f32
    %8 = vector.broadcast %cst : f32 to vector<2x8x128xf32>
    %9 = arith.addf %5, %8 : vector<2x8x128xf32>
    %cst_4 = arith.constant 1.000000e-10 : f32
    %10 = vector.broadcast %cst_4 : f32 to vector<2x8x128xf32>
    %11 = arith.addf %6, %10 : vector<2x8x128xf32>
    %12 = arith.addf %9, %11 : vector<2x8x128xf32>
    %cst_5 = arith.constant 5.000000e-01 : f32
    %13 = vector.broadcast %cst_5 : f32 to vector<2x8x128xf32>
    %14 = arith.mulf %13, %12 : vector<2x8x128xf32>
    %15 = math.log %9 : vector<2x8x128xf32>
    %16 = math.log %11 : vector<2x8x128xf32>
    %17 = math.log %14 : vector<2x8x128xf32>
    %c0_6 = arith.constant 0 : index
    %c0_7 = arith.constant 0 : index
    %c0_8 = arith.constant 0 : index
    %18 = vector.load %arg5[%c0_6, %c0_7, %c0_8] : memref<4x8x128xf32, #tpu.memory_space<vmem>>, vector<1x8x128xf32>
    %19 = vector.shape_cast %18 : vector<1x8x128xf32> to vector<8x128xf32>
    %20 = math.absf %7 : vector<2x8x128xf32>
    %cst_9 = arith.constant dense<0.000000e+00> : vector<8x128xf32>
    %21 = vector.multi_reduction <add>, %20, %cst_9 [0] : vector<2x8x128xf32> to vector<8x128xf32>
    %22 = arith.addf %19, %21 : vector<8x128xf32>
    %c0_10 = arith.constant 0 : index
    %c0_11 = arith.constant 0 : index
    %c0_12 = arith.constant 0 : index
    %23 = vector.load %arg5[%c0_10, %c0_11, %c0_12] : memref<4x8x128xf32, #tpu.memory_space<vmem>>, vector<1x8x128xf32>
    %24 = vector.shape_cast %23 : vector<1x8x128xf32> to vector<8x128xf32>
    %25 = vector.shape_cast %22 : vector<8x128xf32> to vector<1x8x128xf32>
    tpu.vector_store %arg5[%c0_10, %c0_11, %c0_12], %25 {strides = array<i32>} : memref<4x8x128xf32, #tpu.memory_space<vmem>>, vector<1x8x128xf32>,
    %c1 = arith.constant 1 : index
    %c0_13 = arith.constant 0 : index
    %c0_14 = arith.constant 0 : index
    %26 = vector.load %arg5[%c1, %c0_13, %c0_14] : memref<4x8x128xf32, #tpu.memory_space<vmem>>, vector<1x8x128xf32>
    %27 = vector.shape_cast %26 : vector<1x8x128xf32> to vector<8x128xf32>
    %28 = arith.mulf %7, %7 : vector<2x8x128xf32>
    %cst_15 = arith.constant dense<0.000000e+00> : vector<8x128xf32>
    %29 = vector.multi_reduction <add>, %28, %cst_15 [0] : vector<2x8x128xf32> to vector<8x128xf32>
    %30 = arith.addf %27, %29 : vector<8x128xf32>
    %c1_16 = arith.constant 1 : index
    %c0_17 = arith.constant 0 : index
    %c0_18 = arith.constant 0 : index
    %31 = vector.load %arg5[%c1_16, %c0_17, %c0_18] : memref<4x8x128xf32, #tpu.memory_space<vmem>>, vector<1x8x128xf32>
    %32 = vector.shape_cast %31 : vector<1x8x128xf32> to vector<8x128xf32>
    %33 = vector.shape_cast %30 : vector<8x128xf32> to vector<1x8x128xf32>
    tpu.vector_store %arg5[%c1_16, %c0_17, %c0_18], %33 {strides = array<i32>} : memref<4x8x128xf32, #tpu.memory_space<vmem>>, vector<1x8x128xf32>,
    %c2 = arith.constant 2 : index
    %c0_19 = arith.constant 0 : index
    %c0_20 = arith.constant 0 : index
    %34 = vector.load %arg5[%c2, %c0_19, %c0_20] : memref<4x8x128xf32, #tpu.memory_space<vmem>>, vector<1x8x128xf32>
    %35 = vector.shape_cast %34 : vector<1x8x128xf32> to vector<8x128xf32>
    %36 = arith.subf %15, %16 : vector<2x8x128xf32>
    %37 = arith.mulf %9, %36 : vector<2x8x128xf32>
    %cst_21 = arith.constant dense<0.000000e+00> : vector<8x128xf32>
    %38 = vector.multi_reduction <add>, %37, %cst_21 [0] : vector<2x8x128xf32> to vector<8x128xf32>
    %39 = arith.addf %35, %38 : vector<8x128xf32>
    %c2_22 = arith.constant 2 : index
    %c0_23 = arith.constant 0 : index
    %c0_24 = arith.constant 0 : index
    %40 = vector.load %arg5[%c2_22, %c0_23, %c0_24] : memref<4x8x128xf32, #tpu.memory_space<vmem>>, vector<1x8x128xf32>
    %41 = vector.shape_cast %40 : vector<1x8x128xf32> to vector<8x128xf32>
    %42 = vector.shape_cast %39 : vector<8x128xf32> to vector<1x8x128xf32>
    tpu.vector_store %arg5[%c2_22, %c0_23, %c0_24], %42 {strides = array<i32>} : memref<4x8x128xf32, #tpu.memory_space<vmem>>, vector<1x8x128xf32>,
    %c3 = arith.constant 3 : index
    %c0_25 = arith.constant 0 : index
    %c0_26 = arith.constant 0 : index
    %43 = vector.load %arg5[%c3, %c0_25, %c0_26] : memref<4x8x128xf32, #tpu.memory_space<vmem>>, vector<1x8x128xf32>
    %44 = vector.shape_cast %43 : vector<1x8x128xf32> to vector<8x128xf32>
    %45 = arith.subf %15, %17 : vector<2x8x128xf32>
    %46 = arith.mulf %9, %45 : vector<2x8x128xf32>
    %47 = arith.subf %16, %17 : vector<2x8x128xf32>
    %48 = arith.mulf %11, %47 : vector<2x8x128xf32>
    %49 = arith.addf %46, %48 : vector<2x8x128xf32>
    %cst_27 = arith.constant dense<0.000000e+00> : vector<8x128xf32>
    %50 = vector.multi_reduction <add>, %49, %cst_27 [0] : vector<2x8x128xf32> to vector<8x128xf32>
    %51 = arith.addf %44, %50 : vector<8x128xf32>
    %c3_28 = arith.constant 3 : index
    %c0_29 = arith.constant 0 : index
    %c0_30 = arith.constant 0 : index
    %52 = vector.load %arg5[%c3_28, %c0_29, %c0_30] : memref<4x8x128xf32, #tpu.memory_space<vmem>>, vector<1x8x128xf32>
    %53 = vector.shape_cast %52 : vector<1x8x128xf32> to vector<8x128xf32>
    %54 = vector.shape_cast %51 : vector<8x128xf32> to vector<1x8x128xf32>
    tpu.vector_store %arg5[%c3_28, %c0_29, %c0_30], %54 {strides = array<i32>} : memref<4x8x128xf32, #tpu.memory_space<vmem>>, vector<1x8x128xf32>,
    %c0_i32_31 = arith.constant 0 : i32
    %55 = arith.cmpi eq, %arg1, %c0_i32_31 : i32
    %56 = arith.extui %55 : i1 to i32
    %c0_i32_32 = arith.constant 0 : i32
    %57 = arith.cmpi ne, %56, %c0_i32_32 : i32
    scf.if %57 {
      %c0_33 = arith.constant 0 : index
      %c0_34 = arith.constant 0 : index
      %c0_35 = arith.constant 0 : index
      %58 = vector.load %arg5[%c0_33, %c0_34, %c0_35] : memref<4x8x128xf32, #tpu.memory_space<vmem>>, vector<4x8x128xf32>
      %c0_36 = arith.constant 0 : index
      %c0_37 = arith.constant 0 : index
      %c0_38 = arith.constant 0 : index
      %c0_39 = arith.constant 0 : index
      %59 = vector.load %arg4[%c0_36, %c0_37, %c0_38, %c0_39] : memref<1x4x8x128xf32, #tpu.memory_space<vmem>>, vector<1x4x8x128xf32>
      %60 = vector.shape_cast %59 : vector<1x4x8x128xf32> to vector<4x8x128xf32>
      %61 = vector.shape_cast %58 : vector<4x8x128xf32> to vector<1x4x8x128xf32>
      tpu.vector_store %arg4[%c0_36, %c0_37, %c0_38, %c0_39], %61 {strides = array<i32>} : memref<1x4x8x128xf32, #tpu.memory_space<vmem>>, vector<1x4x8x128xf32>,
    } else {
    }
    return
  }
  func.func @transform_0(%arg0: i32, %arg1: i32) -> (i32, i32) {
    %c1_i32 = arith.constant 1 : i32
    %0 = arith.muli %arg0, %c1_i32 : i32
    %1 = arith.addi %0, %arg1 : i32
    %c0_i32 = arith.constant 0 : i32
    %c0_i32_0 = arith.constant 0 : i32
    return %1, %c0_i32 : i32, i32
  }
  func.func @transform_1(%arg0: i32, %arg1: i32) -> (i32, i32) {
    %c1_i32 = arith.constant 1 : i32
    %0 = arith.muli %arg0, %c1_i32 : i32
    %1 = arith.addi %0, %arg1 : i32
    %c0_i32 = arith.constant 0 : i32
    %c0_i32_0 = arith.constant 0 : i32
    return %1, %c0_i32 : i32, i32
  }
  func.func @transform_2(%arg0: i32, %arg1: i32) -> (i32, i32, i32, i32) {
    %c0_i32 = arith.constant 0 : i32
    %c0_i32_0 = arith.constant 0 : i32
    %c0_i32_1 = arith.constant 0 : i32
    %c0_i32_2 = arith.constant 0 : i32
    return %arg0, %c0_i32, %c0_i32_0, %c0_i32_1 : i32, i32, i32, i32
  }
}

</mosaic_0001>

<llo_original>
// kernel: tpu_custom_call.1
$region0: #{tpu_custom_call.1}
  #allocation0 [shape = 'u32[]', space=smem, size = 0x4, offset = 0x4, fixed_abs, tag = 'smem constant byte address 0x4 - core index']
  #allocation1 [shape = 'u32[144,128]{1,0:T(1,128)}', space=vmem, size = 0x12000, scoped, tag = 'internal scratch']
  #allocation2 [shape = 'f32[4,8,128]{2,1,0:T(8,128)}', space=vmem, size = 0x4000, scoped, tag = 'scratch operand']
  %s0 = inlined_call_operand.hbm [shape: f32[16,128], index: 0, kind: input, shape index: {}]
  %s1 = inlined_call_operand.hbm [shape: f32[16,128], index: 1, kind: input, shape index: {}]
  %s2 = inlined_call_operand.hbm [shape: f32[1,4,8,128], index: 2, kind: output, shape index: {}]
  %s3 = sld [smem:[#allocation0]]
  $region34: #{tpu_custom_call.1} parent=0
    _
  %s5 = ssub.s32 1, %s3
  %s6 = scalar_select 0, %s5, %s3
  $region1: #{tpu_custom_call.1} parent=0
    #allocation3 [shape = 'u8[8192]{0}', space=vmem, size = 0x2000, scoped, tag = 'input window, operand 0, single buffered']
    #allocation4 [shape = 's32[1]{0}', space=sflag, size = 0x4, scoped, tag = 'scoped memory for tpu_custom_call.1']
    #allocation5 [shape = 's32[1]{0}', space=sflag, size = 0x4, scoped, tag = 'scoped memory for tpu_custom_call.1']
    #allocation6 [shape = 'u8[8192]{0}', space=vmem, size = 0x2000, scoped, tag = 'input window, operand 1, single buffered']
    #allocation7 [shape = 's32[1]{0}', space=sflag, size = 0x4, scoped, tag = 'scoped memory for tpu_custom_call.1']
    #allocation8 [shape = 'u8[16384]{0}', space=vmem, size = 0x4000, scoped, tag = 'output window, operand 0, single buffered']
    %7 = vsyncpa [#allocation4], 0
    %8 = vsyncpa [#allocation7], 0
    %9 = vsyncpa [#allocation5], 0
    // Predicated region
    $region2: #{tpu_custom_call.1} parent=1 // pred_check
      _
    $region3: #{tpu_custom_call.1} parent=1 // pred_check_branch
      %11 = sbr.rel (0) target = $region5
    $region4: #{tpu_custom_call.1} parent=1 // pred_region
      %s12 = sadd.s32 0, 0
      %s13 = smul.u32 2, %s12
      %s15 = ssub.s32 256, 256
      %16 = vsyncadd [#allocation4], %s15
      %s17 = smul.addr %s13, 128
      %s18 = scalar_lea.hbm %s0, %s17
      %s19 = sshll.u32 [#allocation3], 4
      %s20 = int_to_ptr.vmem [resolvable:$true] %s19
      %25 = dma.hbm_to_vmem [thread:$0]  %s18, 256, %s20, [#allocation4], 128, 128, 8
    $region5: #{tpu_custom_call.1} parent=1 // pred_fallthru
      _
    // Predicated region
    $region6: #{tpu_custom_call.1} parent=1 // pred_check
      _
    $region7: #{tpu_custom_call.1} parent=1 // pred_check_branch
      %27 = sbr.rel (0) target = $region9
    $region8: #{tpu_custom_call.1} parent=1 // pred_region
      %s28 = sadd.s32 0, 0
      %s29 = smul.u32 2, %s28
      %s31 = ssub.s32 256, 256
      %32 = vsyncadd [#allocation7], %s31
      %s33 = smul.addr %s29, 128
      %s34 = scalar_lea.hbm %s1, %s33
      %s35 = sshll.u32 [#allocation6], 4
      %s36 = int_to_ptr.vmem [resolvable:$true] %s35
      %41 = dma.hbm_to_vmem [thread:$0]  %s34, 256, %s36, [#allocation7], 128, 128, 8
    $region9: #{tpu_custom_call.1} parent=1 // pred_fallthru
      _
    // Predicated region
    $region10: #{tpu_custom_call.1} parent=1 // pred_check
      _
    $region11: #{tpu_custom_call.1} parent=1 // pred_check_branch
      %43 = sbr.rel (0) target = $region13
    $region12: #{tpu_custom_call.1} parent=1 // pred_region
      %44 = dma.done [#allocation4], 256
    $region13: #{tpu_custom_call.1} parent=1 // pred_fallthru
      _
    // Predicated region
    $region14: #{tpu_custom_call.1} parent=1 // pred_check
      _
    $region15: #{tpu_custom_call.1} parent=1 // pred_check_branch
      %46 = sbr.rel (0) target = $region17
    $region16: #{tpu_custom_call.1} parent=1 // pred_region
      %47 = dma.done [#allocation7], 256
    $region17: #{tpu_custom_call.1} parent=1 // pred_fallthru
      _
    %s48 = sadd.s32 0, 0
    %s49 = smul.u32 2, %s48
    %s50 = sadd.s32 0, 0
    %s51 = smul.u32 2, %s50
    %p52 = scmp.eq.s32.totalorder 0, 0
    // Predicated region
    $region18: #{tpu_custom_call.1} parent=1 // pred_check
      %p53 = pneg %p52
    $region19: #{tpu_custom_call.1} parent=1 // pred_check_branch
      %55 = sbr.rel (%p53) target = $region21
    $region20: #{tpu_custom_call.1} parent=1 // pred_region
      %56 = vst [vmem:[#allocation2] sm:$0xff] 0.0
      %57 = vst [vmem:[#allocation2 + $0x8] sm:$0xff] 0.0
      %58 = vst [vmem:[#allocation2 + $0x10] sm:$0xff] 0.0
      %59 = vst [vmem:[#allocation2 + $0x18] sm:$0xff] 0.0
    $region21: #{tpu_custom_call.1} parent=1 // pred_fallthru
      _
    %v60 = vld [vmem:[#allocation3] sm:$0xff]
    %v61 = vld [vmem:[#allocation3 + $0x8] sm:$0xff]
    %v62 = vld [vmem:[#allocation6] sm:$0xff]
    %v63 = vld [vmem:[#allocation6 + $0x8] sm:$0xff]
    %v64 = vsub.f32 %v60, %v62
    %v65 = vsub.f32 %v61, %v63
    %v66 = vadd.f32 %v60, 1e-10
    %v67 = vadd.f32 %v61, 1e-10
    %v68 = vadd.f32 %v62, 1e-10
    %v69 = vadd.f32 %v63, 1e-10
    %v70 = vadd.f32 %v66, %v68
    %v71 = vadd.f32 %v67, %v69
    %v72 = vmul.f32 %v70, 0.5
    %v73 = vmul.f32 %v71, 0.5
    %v74 = vlog2.pop %v66
    %v75 = vmul.f32 %v74, 0.6931472
    %v76 = vlog2.pop %v67
    %v77 = vmul.f32 %v76, 0.6931472
    %v78 = vlog2.pop %v68
    %v79 = vmul.f32 %v78, 0.6931472
    %v80 = vlog2.pop %v69
    %v81 = vmul.f32 %v80, 0.6931472
    %v82 = vlog2.pop %v72
    %v83 = vmul.f32 %v82, 0.6931472
    %v84 = vlog2.pop %v73
    %v85 = vmul.f32 %v84, 0.6931472
    %v86 = vld [vmem:[#allocation2] sm:$0xff]
    %v87 = vand.u32 2147483647, %v64
    %v88 = vand.u32 2147483647, %v65
    %v89 = vadd.f32 %v87, %v88
    %v90 = vadd.f32 %v86, %v89
    %91 = vst [vmem:[#allocation2] sm:$0xff] %v90
    %s92 = scalar_lea.vmem [#allocation2], 8
    %v93 = vld [vmem:[%s92] sm:$0xff]
    %v94 = vmul.f32 %v64, %v64
    %v95 = vmul.f32 %v65, %v65
    %v96 = vadd.f32 %v94, %v95
    %v97 = vadd.f32 %v93, %v96
    %98 = vst [vmem:[%s92] sm:$0xff] %v97
    %s99 = scalar_lea.vmem [#allocation2], 16
    %v100 = vld [vmem:[%s99] sm:$0xff]
    %v101 = vsub.f32 %v75, %v79
    %v102 = vsub.f32 %v77, %v81
    %v103 = vmul.f32 %v66, %v101
    %v104 = vmul.f32 %v67, %v102
    %v105 = vadd.f32 %v103, %v104
    %v106 = vadd.f32 %v100, %v105
    %107 = vst [vmem:[%s99] sm:$0xff] %v106
    %s108 = scalar_lea.vmem [#allocation2], 24
    %v109 = vld [vmem:[%s108] sm:$0xff]
    %v110 = vsub.f32 %v75, %v83
    %v111 = vsub.f32 %v77, %v85
    %v112 = vmul.f32 %v66, %v110
    %v113 = vmul.f32 %v67, %v111
    %v114 = vsub.f32 %v79, %v83
    %v115 = vsub.f32 %v81, %v85
    %v116 = vmul.f32 %v68, %v114
    %v117 = vmul.f32 %v69, %v115
    %v118 = vadd.f32 %v112, %v116
    %v119 = vadd.f32 %v113, %v117
    %v120 = vadd.f32 %v118, %v119
    %v121 = vadd.f32 %v109, %v120
    %122 = vst [vmem:[%s108] sm:$0xff] %v121
    // Predicated region
    $region22: #{tpu_custom_call.1} parent=1 // pred_check
      %p123 = pneg %p52
    $region23: #{tpu_custom_call.1} parent=1 // pred_check_branch
      %125 = sbr.rel (%p123) target = $region25
    $region24: #{tpu_custom_call.1} parent=1 // pred_region
      %v126 = vld [vmem:[#allocation2] sm:$0xff]
      %v127 = vld [vmem:[#allocation2 + $0x8] sm:$0xff]
      %v128 = vld [vmem:[#allocation2 + $0x10] sm:$0xff]
      %v129 = vld [vmem:[#allocation2 + $0x18] sm:$0xff]
      %130 = vst [vmem:[#allocation8] sm:$0xff] %v126
      %131 = vst [vmem:[#allocation8 + $0x8] sm:$0xff] %v127
      %132 = vst [vmem:[#allocation8 + $0x10] sm:$0xff] %v128
      %133 = vst [vmem:[#allocation8 + $0x18] sm:$0xff] %v129
    $region25: #{tpu_custom_call.1} parent=1 // pred_fallthru
      _
    // Predicated region
    $region26: #{tpu_custom_call.1} parent=1 // pred_check
      _
    $region27: #{tpu_custom_call.1} parent=1 // pred_check_branch
      %135 = sbr.rel (0) target = $region29
    $region28: #{tpu_custom_call.1} parent=1 // pred_region
      %s137 = ssub.s32 512, 512
      %138 = vsyncadd [#allocation5], %s137
      %s139 = sshll.u32 [#allocation8], 4
      %s140 = int_to_ptr.vmem [resolvable:$true] %s139
      %145 = dma.vmem_to_hbm [thread:$0]  %s140, 512, %s2, [#allocation5], 128, 128, 8
    $region29: #{tpu_custom_call.1} parent=1 // pred_fallthru
      _
    // Predicated region
    $region30: #{tpu_custom_call.1} parent=1 // pred_check
      _
    $region31: #{tpu_custom_call.1} parent=1 // pred_check_branch
      %147 = sbr.rel (0) target = $region33
    $region32: #{tpu_custom_call.1} parent=1 // pred_region
      %148 = dma.done [#allocation5], 512
    $region33: #{tpu_custom_call.1} parent=1 // pred_fallthru
      _
    %149 = vsyncpa [#allocation4], 1
    %150 = vsyncpa [#allocation7], 1
    %151 = vsyncpa [#allocation5], 1

</llo_original>
